<compile_context>
chip_gen: v7x
topology: tpu7x:2x2x1
jax: 0.10.0
libtpu: 0.0.40
codegen_flags: <defaults>
</compile_context>

<pallas_src>
import functools

import jax
import jax.numpy as jnp
from jax.experimental import pallas as pl
from jax.experimental.pallas import tpu as pltpu

LANE = 128
HIDDEN = 64     # real hidden width of the MLP
HPAD = 128      # hidden width padded to one full lane group (zero-padded)


def _round_up(x, m):
    return ((x + m - 1) // m) * m


def idm_kernel(ob_ref, nob_ref, w1a_ref, w1b_ref, b1_ref, w2_ref, b2_ref,
               w3_ref, b3_ref, out_ref):
    # Layer 1, fused over the concatenation: cat([ob, nob], 1) @ W1 ==
    # ob @ W1[:E] + nob @ W1[E:].  bf16 MXU inputs, f32 accumulation.
    ob = ob_ref[...].astype(jnp.bfloat16)
    nob = nob_ref[...].astype(jnp.bfloat16)
    h1 = (jnp.dot(ob, w1a_ref[...], preferred_element_type=jnp.float32)
          + jnp.dot(nob, w1b_ref[...], preferred_element_type=jnp.float32)
          + b1_ref[...])
    h1 = jnp.maximum(h1, 0.0)

    # Layer 2: (tb, 128) @ (128, 128); padded hidden cols stay exactly 0.
    h2 = jnp.dot(h1.astype(jnp.bfloat16), w2_ref[...],
                 preferred_element_type=jnp.float32) + b2_ref[...]
    h2 = jnp.maximum(h2, 0.0)

    # Layer 3: padded action columns carry a -1e30 bias, so they contribute
    # exp(-huge) == 0 to the softmax denominator.
    logits = jnp.dot(h2.astype(jnp.bfloat16), w3_ref[...],
                     preferred_element_type=jnp.float32) + b3_ref[...]

    # Numerically stable softmax over the (padded) action axis.
    # NOTE: a ragged tail block may contain garbage rows; softmax is per-row
    # and those rows are masked on store, so they cannot contaminate results.
    m = jnp.max(logits, axis=-1, keepdims=True)
    e = jnp.exp(logits - m)
    denom = jnp.sum(e, axis=-1, keepdims=True)
    out_ref[...] = (e * pl.reciprocal(denom, approx=True)).astype(out_ref.dtype)


def dis_inverse_dynamic_model(ob_emb, next_ob_emb, params, *, block_b=4096):
    """ob_emb, next_ob_emb: (B, E) float32 -> (B, A) bf16 softmax probabilities."""
    w1, b1, w2, b2, w3, b3 = params
    B, E = ob_emb.shape
    A = w3.shape[1]
    A_pad = _round_up(A, LANE)

    # ---- weight prep (tiny, one-time under jit): bf16 weights, f32 biases,
    # hidden width and action dim zero-padded to full 128-lane groups.
    w1a = jnp.zeros((E, HPAD), jnp.bfloat16).at[:, :HIDDEN].set(
        w1[:E].astype(jnp.bfloat16))
    w1b = jnp.zeros((E, HPAD), jnp.bfloat16).at[:, :HIDDEN].set(
        w1[E:].astype(jnp.bfloat16))
    b1p = jnp.zeros((1, HPAD), jnp.float32).at[:, :HIDDEN].set(b1)
    w2p = jnp.zeros((HPAD, HPAD), jnp.bfloat16).at[:HIDDEN, :HIDDEN].set(
        w2.astype(jnp.bfloat16))
    b2p = jnp.zeros((1, HPAD), jnp.float32).at[:, :HIDDEN].set(b2)
    w3p = jnp.zeros((HPAD, A_pad), jnp.bfloat16).at[:HIDDEN, :A].set(
        w3.astype(jnp.bfloat16))
    b3p = jnp.full((1, A_pad), -1e30, jnp.float32).at[:, :A].set(b3)

    # ---- batch tile: big enough to amortize the ~0.35 us/grid-step overhead,
    # small enough to fit VMEM (2x-buffered in/out tiles + in-body f32
    # intermediates), and giving >= 2 grid steps so v7x's 2 TCs both get work.
    bytes_per_row = (2 * E * 4 * 2        # two f32 input tiles, double-buffered
                     + A_pad * 2 * 2      # bf16 output tile, double-buffered
                     + HPAD * 4 * 6)      # f32 intermediates headroom (h1,h2,...)
    vmem_budget = 40 * 1024 * 1024        # safe under v7x's 64 MiB physical VMEM
    tb_budget = max(8, ((vmem_budget // bytes_per_row) // 8) * 8)
    tb_two_steps = (_round_up(-(-B // 2), 8) if B >= 16 else _round_up(B, 8))
    tb = max(8, min(_round_up(block_b, 8), tb_budget, tb_two_steps))
    grid = (pl.cdiv(B, tb),)              # ragged tail block; OOB rows masked

    vmem_limit = int(min(tb * bytes_per_row + (2 << 20), 48 * 1024 * 1024))

    out = pl.pallas_call(
        idm_kernel,
        out_shape=jax.ShapeDtypeStruct((B, A_pad), jnp.bfloat16),
        grid=grid,
        in_specs=[
            pl.BlockSpec((tb, E), lambda i: (i, 0)),        # ob_emb tile
            pl.BlockSpec((tb, E), lambda i: (i, 0)),        # next_ob_emb tile
            pl.BlockSpec((E, HPAD), lambda i: (0, 0)),      # W1[:E]   (resident)
            pl.BlockSpec((E, HPAD), lambda i: (0, 0)),      # W1[E:]   (resident)
            pl.BlockSpec((1, HPAD), lambda i: (0, 0)),      # b1
            pl.BlockSpec((HPAD, HPAD), lambda i: (0, 0)),   # W2
            pl.BlockSpec((1, HPAD), lambda i: (0, 0)),      # b2
            pl.BlockSpec((HPAD, A_pad), lambda i: (0, 0)),  # W3
            pl.BlockSpec((1, A_pad), lambda i: (0, 0)),     # b3 (-1e30 pad)
        ],
        out_specs=pl.BlockSpec((tb, A_pad), lambda i: (i, 0)),
        compiler_params=pltpu.CompilerParams(
            dimension_semantics=("parallel",),
            vmem_limit_bytes=vmem_limit),
    )(ob_emb, next_ob_emb, w1a, w1b, b1p, w2p, b2p, w3p, b3p)

    # Rows already equal B; only the action lanes are padded.  Under jit this
    # lane slice fuses into the consumer (callers that can handle the padded
    # lane-dense layout should consume `out` directly instead).
    return out[:, :A]


def init_params(key, embedding_size, action_shape):
    """Deterministic synthetic parameters (no checkpoint). Stored as (in, out)."""
    in1 = embedding_size * 2
    h1, h2 = HIDDEN, HIDDEN  # see TODO(synk) above
    ks = jax.random.split(key, 6)
    w1 = jax.random.normal(ks[0], (in1, h1), jnp.float32) * 0.1
    b1 = jax.random.normal(ks[1], (1, h1), jnp.float32) * 0.1
    w2 = jax.random.normal(ks[2], (h1, h2), jnp.float32) * 0.1
    b2 = jax.random.normal(ks[3], (1, h2), jnp.float32) * 0.1
    w3 = jax.random.normal(ks[4], (h2, action_shape), jnp.float32) * 0.1
    b3 = jax.random.normal(ks[5], (1, action_shape), jnp.float32) * 0.1
    return (w1, b1, w2, b2, w3, b3)


def reference(ob_emb, next_ob_emb, params):
    """Plain-JAX f32 reference for correctness checking."""
    w1, b1, w2, b2, w3, b3 = params
    x = jnp.concatenate([ob_emb, next_ob_emb], axis=1)
    h1 = jax.nn.relu(x @ w1 + b1)
    h2 = jax.nn.relu(h1 @ w2 + b2)
    return jax.nn.softmax(h2 @ w3 + b3, axis=1)


if __name__ == "__main__":
    # Small shapes; B deliberately not a multiple of the batch tile and
    # block_b=8 so the ragged-tail grid path (3 steps, masked stores) is hit.
    B, E, A = 20, 16, 6
    key = jax.random.PRNGKey(0)
    k_ob, k_nob, k_params = jax.random.split(key, 3)

    ob_emb = jax.random.normal(k_ob, (B, E), jnp.float32)
    next_ob_emb = jax.random.normal(k_nob, (B, E), jnp.float32)
    params = init_params(k_params, E, A)

    fwd = jax.jit(functools.partial(dis_inverse_dynamic_model, block_b=8))
    pred_action = jax.block_until_ready(fwd(ob_emb, next_ob_emb, params))

    ref = reference(ob_emb, next_ob_emb, params)
    assert pred_action.shape == (B, A)
    assert pred_action.dtype == jnp.bfloat16
    pred_f32 = pred_action.astype(jnp.float32)
    # bf16 weights/output + approx reciprocal => looser tolerance than pure f32.
    assert jnp.allclose(pred_f32, ref, atol=2e-2, rtol=2e-2)
    assert jnp.allclose(jnp.sum(pred_f32, axis=1), 1.0, atol=2e-2)

    print("KERNEL_OK")
</pallas_src>

<mosaic_0001>
module attributes {stable_mosaic.version = 11 : i64} {
  func.func @idm_kernel(%arg0: i32, %arg1: memref<8x16xf32, #tpu.memory_space<vmem>>, %arg2: memref<8x16xf32, #tpu.memory_space<vmem>>, %arg3: memref<16x128xbf16, #tpu.memory_space<vmem>>, %arg4: memref<16x128xbf16, #tpu.memory_space<vmem>>, %arg5: memref<1x128xf32, #tpu.memory_space<vmem>>, %arg6: memref<128x128xbf16, #tpu.memory_space<vmem>>, %arg7: memref<1x128xf32, #tpu.memory_space<vmem>>, %arg8: memref<128x128xbf16, #tpu.memory_space<vmem>>, %arg9: memref<1x128xf32, #tpu.memory_space<vmem>>, %arg10: memref<8x128xbf16, #tpu.memory_space<vmem>>) attributes {dimension_semantics = [#tpu.dimension_semantics<parallel>], iteration_bounds = array<i64: 3>, scalar_prefetch = 0 : i64, scratch_operands = 0 : i64, tpu.core_type = #tpu.core_type<tc>, window_params = [{transform_indices = @transform_0, window_bounds = array<i64: 8, 16>}, {transform_indices = @transform_1, window_bounds = array<i64: 8, 16>}, {pipeline_mode = #tpu.pipeline_mode<synchronous>, transform_indices = @transform_2, window_bounds = array<i64: 16, 128>}, {pipeline_mode = #tpu.pipeline_mode<synchronous>, transform_indices = @transform_3, window_bounds = array<i64: 16, 128>}, {pipeline_mode = #tpu.pipeline_mode<synchronous>, transform_indices = @transform_4, window_bounds = array<i64: 1, 128>}, {pipeline_mode = #tpu.pipeline_mode<synchronous>, transform_indices = @transform_5, window_bounds = array<i64: 128, 128>}, {pipeline_mode = #tpu.pipeline_mode<synchronous>, transform_indices = @transform_6, window_bounds = array<i64: 1, 128>}, {pipeline_mode = #tpu.pipeline_mode<synchronous>, transform_indices = @transform_7, window_bounds = array<i64: 128, 128>}, {pipeline_mode = #tpu.pipeline_mode<synchronous>, transform_indices = @transform_8, window_bounds = array<i64: 1, 128>}, {transform_indices = @transform_9, window_bounds = array<i64: 8, 128>}]} {
    %c0 = arith.constant 0 : index
    %c0_0 = arith.constant 0 : index
    %0 = vector.load %arg1[%c0, %c0_0] : memref<8x16xf32, #tpu.memory_space<vmem>>, vector<8x16xf32>
    %1 = arith.truncf %0 : vector<8x16xf32> to vector<8x16xbf16>
    %c0_1 = arith.constant 0 : index
    %c0_2 = arith.constant 0 : index
    %2 = vector.load %arg2[%c0_1, %c0_2] : memref<8x16xf32, #tpu.memory_space<vmem>>, vector<8x16xf32>
    %3 = arith.truncf %2 : vector<8x16xf32> to vector<8x16xbf16>
    %c0_3 = arith.constant 0 : index
    %c0_4 = arith.constant 0 : index
    %4 = vector.load %arg3[%c0_3, %c0_4] : memref<16x128xbf16, #tpu.memory_space<vmem>>, vector<16x128xbf16>
    %cst = arith.constant dense<0.000000e+00> : vector<8x128xf32>
    %5 = tpu.matmul %1, %4, %cst {dimension_numbers = #tpu.dot_dimension_numbers<[1], [0], [0], [1], [0, 0, 1, 1], [], []>} : vector<8x16xbf16>, vector<16x128xbf16>, vector<8x128xf32> -> vector<8x128xf32>
    %c0_5 = arith.constant 0 : index
    %c0_6 = arith.constant 0 : index
    %6 = vector.load %arg4[%c0_5, %c0_6] : memref<16x128xbf16, #tpu.memory_space<vmem>>, vector<16x128xbf16>
    %cst_7 = arith.constant dense<0.000000e+00> : vector<8x128xf32>
    %7 = tpu.matmul %3, %6, %cst_7 {dimension_numbers = #tpu.dot_dimension_numbers<[1], [0], [0], [1], [0, 0, 1, 1], [], []>} : vector<8x16xbf16>, vector<16x128xbf16>, vector<8x128xf32> -> vector<8x128xf32>
    %8 = arith.addf %5, %7 : vector<8x128xf32>
    %c0_8 = arith.constant 0 : index
    %c0_9 = arith.constant 0 : index
    %9 = vector.load %arg5[%c0_8, %c0_9] : memref<1x128xf32, #tpu.memory_space<vmem>>, vector<1x128xf32>
    %10 = vector.broadcast %9 : vector<1x128xf32> to vector<8x128xf32>
    %11 = arith.addf %8, %10 : vector<8x128xf32>
    %cst_10 = arith.constant 0.000000e+00 : f32
    %12 = vector.broadcast %cst_10 : f32 to vector<8x128xf32>
    %13 = arith.maximumf %11, %12 : vector<8x128xf32>
    %14 = arith.truncf %13 : vector<8x128xf32> to vector<8x128xbf16>
    %c0_11 = arith.constant 0 : index
    %c0_12 = arith.constant 0 : index
    %15 = vector.load %arg6[%c0_11, %c0_12] : memref<128x128xbf16, #tpu.memory_space<vmem>>, vector<128x128xbf16>
    %cst_13 = arith.constant dense<0.000000e+00> : vector<8x128xf32>
    %16 = tpu.matmul %14, %15, %cst_13 {dimension_numbers = #tpu.dot_dimension_numbers<[1], [0], [0], [1], [0, 0, 1, 1], [], []>} : vector<8x128xbf16>, vector<128x128xbf16>, vector<8x128xf32> -> vector<8x128xf32>
    %c0_14 = arith.constant 0 : index
    %c0_15 = arith.constant 0 : index
    %17 = vector.load %arg7[%c0_14, %c0_15] : memref<1x128xf32, #tpu.memory_space<vmem>>, vector<1x128xf32>
    %18 = vector.broadcast %17 : vector<1x128xf32> to vector<8x128xf32>
    %19 = arith.addf %16, %18 : vector<8x128xf32>
    %cst_16 = arith.constant 0.000000e+00 : f32
    %20 = vector.broadcast %cst_16 : f32 to vector<8x128xf32>
    %21 = arith.maximumf %19, %20 : vector<8x128xf32>
    %22 = arith.truncf %21 : vector<8x128xf32> to vector<8x128xbf16>
    %c0_17 = arith.constant 0 : index
    %c0_18 = arith.constant 0 : index
    %23 = vector.load %arg8[%c0_17, %c0_18] : memref<128x128xbf16, #tpu.memory_space<vmem>>, vector<128x128xbf16>
    %cst_19 = arith.constant dense<0.000000e+00> : vector<8x128xf32>
    %24 = tpu.matmul %22, %23, %cst_19 {dimension_numbers = #tpu.dot_dimension_numbers<[1], [0], [0], [1], [0, 0, 1, 1], [], []>} : vector<8x128xbf16>, vector<128x128xbf16>, vector<8x128xf32> -> vector<8x128xf32>
    %c0_20 = arith.constant 0 : index
    %c0_21 = arith.constant 0 : index
    %25 = vector.load %arg9[%c0_20, %c0_21] : memref<1x128xf32, #tpu.memory_space<vmem>>, vector<1x128xf32>
    %26 = vector.broadcast %25 : vector<1x128xf32> to vector<8x128xf32>
    %27 = arith.addf %24, %26 : vector<8x128xf32>
    %cst_22 = arith.constant dense<0xFF800000> : vector<8xf32>
    %28 = vector.multi_reduction <maximumf>, %27, %cst_22 [1] : vector<8x128xf32> to vector<8xf32>
    %29 = vector.shape_cast %28 : vector<8xf32> to vector<8x1xf32>
    %30 = vector.broadcast %29 : vector<8x1xf32> to vector<8x128xf32>
    %31 = arith.subf %27, %30 : vector<8x128xf32>
    %32 = math.exp %31 : vector<8x128xf32>
    %cst_23 = arith.constant dense<0.000000e+00> : vector<8xf32>
    %33 = vector.multi_reduction <add>, %32, %cst_23 [1] : vector<8x128xf32> to vector<8xf32>
    %34 = vector.shape_cast %33 : vector<8xf32> to vector<8x1xf32>
    %35 = tpu.reciprocal %34 {approx = true} : vector<8x1xf32> -> vector<8x1xf32>
    %36 = vector.broadcast %35 : vector<8x1xf32> to vector<8x128xf32>
    %37 = arith.mulf %32, %36 : vector<8x128xf32>
    %38 = arith.truncf %37 : vector<8x128xf32> to vector<8x128xbf16>
    %c0_24 = arith.constant 0 : index
    %c0_25 = arith.constant 0 : index
    %39 = vector.load %arg10[%c0_24, %c0_25] : memref<8x128xbf16, #tpu.memory_space<vmem>>, vector<8x128xbf16>
    tpu.vector_store %arg10[%c0_24, %c0_25], %38 {strides = array<i32>} : memref<8x128xbf16, #tpu.memory_space<vmem>>, vector<8x128xbf16>,
    return
  }
  func.func @transform_0(%arg0: i32) -> (i32, i32) {
    %c0_i32 = arith.constant 0 : i32
    %c0_i32_0 = arith.constant 0 : i32
    return %arg0, %c0_i32 : i32, i32
  }
  func.func @transform_1(%arg0: i32) -> (i32, i32) {
    %c0_i32 = arith.constant 0 : i32
    %c0_i32_0 = arith.constant 0 : i32
    return %arg0, %c0_i32 : i32, i32
  }
  func.func @transform_2(%arg0: i32) -> (i32, i32) {
    %c0_i32 = arith.constant 0 : i32
    %c0_i32_0 = arith.constant 0 : i32
    %c0_i32_1 = arith.constant 0 : i32
    return %c0_i32, %c0_i32_0 : i32, i32
  }
  func.func @transform_3(%arg0: i32) -> (i32, i32) {
    %c0_i32 = arith.constant 0 : i32
    %c0_i32_0 = arith.constant 0 : i32
    %c0_i32_1 = arith.constant 0 : i32
    return %c0_i32, %c0_i32_0 : i32, i32
  }
  func.func @transform_4(%arg0: i32) -> (i32, i32) {
    %c0_i32 = arith.constant 0 : i32
    %c0_i32_0 = arith.constant 0 : i32
    %c0_i32_1 = arith.constant 0 : i32
    return %c0_i32, %c0_i32_0 : i32, i32
  }
  func.func @transform_5(%arg0: i32) -> (i32, i32) {
    %c0_i32 = arith.constant 0 : i32
    %c0_i32_0 = arith.constant 0 : i32
    %c0_i32_1 = arith.constant 0 : i32
    return %c0_i32, %c0_i32_0 : i32, i32
  }
  func.func @transform_6(%arg0: i32) -> (i32, i32) {
    %c0_i32 = arith.constant 0 : i32
    %c0_i32_0 = arith.constant 0 : i32
    %c0_i32_1 = arith.constant 0 : i32
    return %c0_i32, %c0_i32_0 : i32, i32
  }
  func.func @transform_7(%arg0: i32) -> (i32, i32) {
    %c0_i32 = arith.constant 0 : i32
    %c0_i32_0 = arith.constant 0 : i32
    %c0_i32_1 = arith.constant 0 : i32
    return %c0_i32, %c0_i32_0 : i32, i32
  }
  func.func @transform_8(%arg0: i32) -> (i32, i32) {
    %c0_i32 = arith.constant 0 : i32
    %c0_i32_0 = arith.constant 0 : i32
    %c0_i32_1 = arith.constant 0 : i32
    return %c0_i32, %c0_i32_0 : i32, i32
  }
  func.func @transform_9(%arg0: i32) -> (i32, i32) {
    %c0_i32 = arith.constant 0 : i32
    %c0_i32_0 = arith.constant 0 : i32
    return %arg0, %c0_i32 : i32, i32
  }
}

</mosaic_0001>

<llo_original>
// kernel: dis_inverse_dynamic_model.1
$region0: #{dis_inverse_dynamic_model.1}
  #allocation0 [shape = 'u32[]', space=smem, size = 0x4, offset = 0x4, fixed_abs, tag = 'smem constant byte address 0x4 - core index']
  #allocation1 [shape = 'u32[144,128]{1,0:T(1,128)}', space=vmem, size = 0x12000, scoped, tag = 'internal scratch']
  %s0 = inlined_call_operand.vmem [shape: f32[20,16], index: 0, kind: input, shape index: {}]
  %s1 = inlined_call_operand.vmem [shape: f32[20,16], index: 1, kind: input, shape index: {}]
  %s2 = inlined_call_operand.vmem [shape: bf16[16,128], index: 2, kind: input, shape index: {}]
  %s3 = inlined_call_operand.vmem [shape: bf16[16,128], index: 3, kind: input, shape index: {}]
  %s4 = inlined_call_operand.vmem [shape: f32[1,128], index: 4, kind: input, shape index: {}]
  %s5 = inlined_call_operand.vmem [shape: bf16[128,128], index: 5, kind: input, shape index: {}]
  %s6 = inlined_call_operand.vmem [shape: f32[1,128], index: 6, kind: input, shape index: {}]
  %s7 = inlined_call_operand.vmem [shape: bf16[128,128], index: 7, kind: input, shape index: {}]
  %s8 = inlined_call_operand.vmem [shape: f32[1,128], index: 8, kind: input, shape index: {}]
  %s9 = inlined_call_operand.vmem [shape: bf16[20,128], index: 9, kind: output, shape index: {}]
  %s10 = sld [smem:[#allocation0]]
  $region69: #{dis_inverse_dynamic_model.1} parent=0
    _
  %s12 = ssub.s32 1, %s10
  %s13 = scalar_select 0, %s12, %s10
  loop: start=0, step=1, limit=5
  $region2: #{dis_inverse_dynamic_model.1} parent=0 // loop_pre_header
    _
  $region3: #{dis_inverse_dynamic_model.1} parent=0 // loop_header
    %s15 = sphi 0, %s19
    %p16 = scmp.ge.s32.totalorder %s15, 5
    %s25 = sphi 0, %s27
    %s28 = sphi 0, %s25
    %s29 = sphi 0, %s28
    %s45 = sphi 0, %s29
    %s51 = sphi 0, %s53
    %s54 = sphi 0, %s51
    %s55 = sphi 0, %s54
    %s71 = sphi 0, %s55
    %s75 = sphi 0, %s75
    %s77 = sphi 0, %s75
    %s78 = sphi 0, %s77
    %s92 = sphi 0, %s78
    %s96 = sphi 0, %s96
    %s98 = sphi 0, %s96
    %s99 = sphi 0, %s98
    %s113 = sphi 0, %s99
    %s117 = sphi 0, %s117
    %s119 = sphi 0, %s117
    %s120 = sphi 0, %s119
    %s134 = sphi 0, %s120
    %s138 = sphi 0, %s138
    %s140 = sphi 0, %s138
    %s141 = sphi 0, %s140
    %s155 = sphi 0, %s141
    %s159 = sphi 0, %s159
    %s161 = sphi 0, %s159
    %s162 = sphi 0, %s161
    %s176 = sphi 0, %s162
    %s180 = sphi 0, %s180
    %s182 = sphi 0, %s180
    %s183 = sphi 0, %s182
    %s197 = sphi 0, %s183
    %s201 = sphi 0, %s201
    %s203 = sphi 0, %s201
    %s204 = sphi 0, %s203
    %s218 = sphi 0, %s204
    %s224 = sphi 0, %s226
    %s227 = sphi 0, %s224
    %s228 = sphi 0, %s227
    %s244 = sphi 0, %s228
  $region4: #{dis_inverse_dynamic_model.1} parent=0 // loop_header_branch
    %18 = sbr.rel (%p16) target = $region8
  $region5: #{dis_inverse_dynamic_model.1} parent=0 // loop_body
    %s20 = ssub.s32 %s15, 1
    %s21 = ssub.s32 %s15, 2
    %s22 = sadd.s32 %s15, 1
    %s23 = ssub.s32 %s15, %s22
    %p24 = scmp.eq.s32.totalorder %s23, 0
    %s26 = sadd.s32 %s25, 1
    %s27 = scalar_select %p24, %s25, %s26
    %p30 = pneg %p24
    %p31 = scmp.eq.s32.totalorder %s15, 2
    %p32 = por %p30, %p31
    %p33 = scmp.ne.s32.totalorder %s25, %s28
    %p34 = scmp.eq.s32.totalorder %s15, 0
    %p35 = por %p33, %p34
    %p36 = scmp.ne.s32.totalorder %s25, %s28
    %p37 = scmp.eq.s32.totalorder %s20, 2
    %p38 = por %p36, %p37
    %p39 = scmp.ne.s32.totalorder %s28, %s29
    %p40 = scmp.eq.s32.totalorder %s20, 0
    %p41 = por %p39, %p40
    %p42 = scmp.ne.s32.totalorder %s28, %s29
    %p43 = scmp.eq.s32.totalorder %s21, 2
    %p44 = por %p42, %p43
    %p46 = scmp.ne.s32.totalorder %s29, %s45
    %p47 = scmp.eq.s32.totalorder %s21, 0
    %p48 = por %p46, %p47
    %s49 = ssub.s32 %s15, %s22
    %p50 = scmp.eq.s32.totalorder %s49, 0
    %s52 = sadd.s32 %s51, 1
    %s53 = scalar_select %p50, %s51, %s52
    %p56 = pneg %p50
    %p57 = scmp.eq.s32.totalorder %s15, 2
    %p58 = por %p56, %p57
    %p59 = scmp.ne.s32.totalorder %s51, %s54
    %p60 = scmp.eq.s32.totalorder %s15, 0
    %p61 = por %p59, %p60
    %p62 = scmp.ne.s32.totalorder %s51, %s54
    %p63 = scmp.eq.s32.totalorder %s20, 2
    %p64 = por %p62, %p63
    %p65 = scmp.ne.s32.totalorder %s54, %s55
    %p66 = scmp.eq.s32.totalorder %s20, 0
    %p67 = por %p65, %p66
    %p68 = scmp.ne.s32.totalorder %s54, %s55
    %p69 = scmp.eq.s32.totalorder %s21, 2
    %p70 = por %p68, %p69
    %p72 = scmp.ne.s32.totalorder %s55, %s71
    %p73 = scmp.eq.s32.totalorder %s21, 0
    %p74 = por %p72, %p73
    %s76 = sadd.s32 %s75, 1
    %p79 = scmp.eq.s32.totalorder %s15, 2
    %p80 = scmp.ne.s32.totalorder %s75, %s77
    %p81 = scmp.eq.s32.totalorder %s15, 0
    %p82 = por %p80, %p81
    %p83 = scmp.ne.s32.totalorder %s75, %s77
    %p84 = scmp.eq.s32.totalorder %s20, 2
    %p85 = por %p83, %p84
    %p86 = scmp.ne.s32.totalorder %s77, %s78
    %p87 = scmp.eq.s32.totalorder %s20, 0
    %p88 = por %p86, %p87
    %p89 = scmp.ne.s32.totalorder %s77, %s78
    %p90 = scmp.eq.s32.totalorder %s21, 2
    %p91 = por %p89, %p90
    %p93 = scmp.ne.s32.totalorder %s78, %s92
    %p94 = scmp.eq.s32.totalorder %s21, 0
    %p95 = por %p93, %p94
    %s97 = sadd.s32 %s96, 1
    %p100 = scmp.eq.s32.totalorder %s15, 2
    %p101 = scmp.ne.s32.totalorder %s96, %s98
    %p102 = scmp.eq.s32.totalorder %s15, 0
    %p103 = por %p101, %p102
    %p104 = scmp.ne.s32.totalorder %s96, %s98
    %p105 = scmp.eq.s32.totalorder %s20, 2
    %p106 = por %p104, %p105
    %p107 = scmp.ne.s32.totalorder %s98, %s99
    %p108 = scmp.eq.s32.totalorder %s20, 0
    %p109 = por %p107, %p108
    %p110 = scmp.ne.s32.totalorder %s98, %s99
    %p111 = scmp.eq.s32.totalorder %s21, 2
    %p112 = por %p110, %p111
    %p114 = scmp.ne.s32.totalorder %s99, %s113
    %p115 = scmp.eq.s32.totalorder %s21, 0
    %p116 = por %p114, %p115
    %s118 = sadd.s32 %s117, 1
    %p121 = scmp.eq.s32.totalorder %s15, 2
    %p122 = scmp.ne.s32.totalorder %s117, %s119
    %p123 = scmp.eq.s32.totalorder %s15, 0
    %p124 = por %p122, %p123
    %p125 = scmp.ne.s32.totalorder %s117, %s119
    %p126 = scmp.eq.s32.totalorder %s20, 2
    %p127 = por %p125, %p126
    %p128 = scmp.ne.s32.totalorder %s119, %s120
    %p129 = scmp.eq.s32.totalorder %s20, 0
    %p130 = por %p128, %p129
    %p131 = scmp.ne.s32.totalorder %s119, %s120
    %p132 = scmp.eq.s32.totalorder %s21, 2
    %p133 = por %p131, %p132
    %p135 = scmp.ne.s32.totalorder %s120, %s134
    %p136 = scmp.eq.s32.totalorder %s21, 0
    %p137 = por %p135, %p136
    %s139 = sadd.s32 %s138, 1
    %p142 = scmp.eq.s32.totalorder %s15, 2
    %p143 = scmp.ne.s32.totalorder %s138, %s140
    %p144 = scmp.eq.s32.totalorder %s15, 0
    %p145 = por %p143, %p144
    %p146 = scmp.ne.s32.totalorder %s138, %s140
    %p147 = scmp.eq.s32.totalorder %s20, 2
    %p148 = por %p146, %p147
    %p149 = scmp.ne.s32.totalorder %s140, %s141
    %p150 = scmp.eq.s32.totalorder %s20, 0
    %p151 = por %p149, %p150
    %p152 = scmp.ne.s32.totalorder %s140, %s141
    %p153 = scmp.eq.s32.totalorder %s21, 2
    %p154 = por %p152, %p153
    %p156 = scmp.ne.s32.totalorder %s141, %s155
    %p157 = scmp.eq.s32.totalorder %s21, 0
    %p158 = por %p156, %p157
    %s160 = sadd.s32 %s159, 1
    %p163 = scmp.eq.s32.totalorder %s15, 2
    %p164 = scmp.ne.s32.totalorder %s159, %s161
    %p165 = scmp.eq.s32.totalorder %s15, 0
    %p166 = por %p164, %p165
    %p167 = scmp.ne.s32.totalorder %s159, %s161
    %p168 = scmp.eq.s32.totalorder %s20, 2
    %p169 = por %p167, %p168
    %p170 = scmp.ne.s32.totalorder %s161, %s162
    %p171 = scmp.eq.s32.totalorder %s20, 0
    %p172 = por %p170, %p171
    %p173 = scmp.ne.s32.totalorder %s161, %s162
    %p174 = scmp.eq.s32.totalorder %s21, 2
    %p175 = por %p173, %p174
    %p177 = scmp.ne.s32.totalorder %s162, %s176
    %p178 = scmp.eq.s32.totalorder %s21, 0
    %p179 = por %p177, %p178
    %s181 = sadd.s32 %s180, 1
    %p184 = scmp.eq.s32.totalorder %s15, 2
    %p185 = scmp.ne.s32.totalorder %s180, %s182
    %p186 = scmp.eq.s32.totalorder %s15, 0
    %p187 = por %p185, %p186
    %p188 = scmp.ne.s32.totalorder %s180, %s182
    %p189 = scmp.eq.s32.totalorder %s20, 2
    %p190 = por %p188, %p189
    %p191 = scmp.ne.s32.totalorder %s182, %s183
    %p192 = scmp.eq.s32.totalorder %s20, 0
    %p193 = por %p191, %p192
    %p194 = scmp.ne.s32.totalorder %s182, %s183
    %p195 = scmp.eq.s32.totalorder %s21, 2
    %p196 = por %p194, %p195
    %p198 = scmp.ne.s32.totalorder %s183, %s197
    %p199 = scmp.eq.s32.totalorder %s21, 0
    %p200 = por %p198, %p199
    %s202 = sadd.s32 %s201, 1
    %p205 = scmp.eq.s32.totalorder %s15, 2
    %p206 = scmp.ne.s32.totalorder %s201, %s203
    %p207 = scmp.eq.s32.totalorder %s15, 0
    %p208 = por %p206, %p207
    %p209 = scmp.ne.s32.totalorder %s201, %s203
    %p210 = scmp.eq.s32.totalorder %s20, 2
    %p211 = por %p209, %p210
    %p212 = scmp.ne.s32.totalorder %s203, %s204
    %p213 = scmp.eq.s32.totalorder %s20, 0
    %p214 = por %p212, %p213
    %p215 = scmp.ne.s32.totalorder %s203, %s204
    %p216 = scmp.eq.s32.totalorder %s21, 2
    %p217 = por %p215, %p216
    %p219 = scmp.ne.s32.totalorder %s204, %s218
    %p220 = scmp.eq.s32.totalorder %s21, 0
    %p221 = por %p219, %p220
    %s222 = ssub.s32 %s15, %s22
    %p223 = scmp.eq.s32.totalorder %s222, 0
    %s225 = sadd.s32 %s224, 1
    %s226 = scalar_select %p223, %s224, %s225
    %p229 = pneg %p223
    %p230 = scmp.eq.s32.totalorder %s15, 2
    %p231 = por %p229, %p230
    %p232 = scmp.ne.s32.totalorder %s224, %s227
    %p233 = scmp.eq.s32.totalorder %s15, 0
    %p234 = por %p232, %p233
    %p235 = scmp.ne.s32.totalorder %s224, %s227
    %p236 = scmp.eq.s32.totalorder %s20, 2
    %p237 = por %p235, %p236
    %p238 = scmp.ne.s32.totalorder %s227, %s228
    %p239 = scmp.eq.s32.totalorder %s20, 0
    %p240 = por %p238, %p239
    %p241 = scmp.ne.s32.totalorder %s227, %s228
    %p242 = scmp.eq.s32.totalorder %s21, 2
    %p243 = por %p241, %p242
    %p245 = scmp.ne.s32.totalorder %s228, %s244
    %p246 = scmp.eq.s32.totalorder %s21, 0
    %p247 = por %p245, %p246
    %p248 = scmp.le.s32.totalorder 1, %s15
    %p249 = scmp.lt.s32.totalorder %s15, 4
    %p250 = pnand %p248, %p249
    %p251 = pneg %p250
    // Predicated region
    $region9: #{dis_inverse_dynamic_model.1} parent=5 // pred_check
      _
    $region10: #{dis_inverse_dynamic_model.1} parent=5 // pred_check_branch
      %253 = sbr.rel (%p250) target = $region12
    $region11: #{dis_inverse_dynamic_model.1} parent=5 // pred_region
      %s254 = ssub.s32 %s15, 1
      // Predicated region
      $region13: #{dis_inverse_dynamic_model.1} parent=11 // pred_check
        %p255 = pneg %p88
      $region14: #{dis_inverse_dynamic_model.1} parent=11 // pred_check_branch
        %257 = sbr.rel (%p255) target = $region16
      $region15: #{dis_inverse_dynamic_model.1} parent=11 // pred_region
        _
      $region16: #{dis_inverse_dynamic_model.1} parent=11 // pred_fallthru
        _
      // Predicated region
      $region17: #{dis_inverse_dynamic_model.1} parent=11 // pred_check
        %p258 = pneg %p109
      $region18: #{dis_inverse_dynamic_model.1} parent=11 // pred_check_branch
        %260 = sbr.rel (%p258) target = $region20
      $region19: #{dis_inverse_dynamic_model.1} parent=11 // pred_region
        _
      $region20: #{dis_inverse_dynamic_model.1} parent=11 // pred_fallthru
        _
      // Predicated region
      $region21: #{dis_inverse_dynamic_model.1} parent=11 // pred_check
        %p261 = pneg %p130
      $region22: #{dis_inverse_dynamic_model.1} parent=11 // pred_check_branch
        %263 = sbr.rel (%p261) target = $region24
      $region23: #{dis_inverse_dynamic_model.1} parent=11 // pred_region
        _
      $region24: #{dis_inverse_dynamic_model.1} parent=11 // pred_fallthru
        _
      // Predicated region
      $region25: #{dis_inverse_dynamic_model.1} parent=11 // pred_check
        %p264 = pneg %p151
      $region26: #{dis_inverse_dynamic_model.1} parent=11 // pred_check_branch
        %266 = sbr.rel (%p264) target = $region28
      $region27: #{dis_inverse_dynamic_model.1} parent=11 // pred_region
        _
      $region28: #{dis_inverse_dynamic_model.1} parent=11 // pred_fallthru
        _
      // Predicated region
      $region29: #{dis_inverse_dynamic_model.1} parent=11 // pred_check
        %p267 = pneg %p172
      $region30: #{dis_inverse_dynamic_model.1} parent=11 // pred_check_branch
        %269 = sbr.rel (%p267) target = $region32
      $region31: #{dis_inverse_dynamic_model.1} parent=11 // pred_region
        _
      $region32: #{dis_inverse_dynamic_model.1} parent=11 // pred_fallthru
        _
      // Predicated region
      $region33: #{dis_inverse_dynamic_model.1} parent=11 // pred_check
        %p270 = pneg %p193
      $region34: #{dis_inverse_dynamic_model.1} parent=11 // pred_check_branch
        %272 = sbr.rel (%p270) target = $region36
      $region35: #{dis_inverse_dynamic_model.1} parent=11 // pred_region
        _
      $region36: #{dis_inverse_dynamic_model.1} parent=11 // pred_fallthru
        _
      // Predicated region
      $region37: #{dis_inverse_dynamic_model.1} parent=11 // pred_check
        %p273 = pneg %p214
      $region38: #{dis_inverse_dynamic_model.1} parent=11 // pred_check_branch
        %275 = sbr.rel (%p273) target = $region40
      $region39: #{dis_inverse_dynamic_model.1} parent=11 // pred_region
        _
      $region40: #{dis_inverse_dynamic_model.1} parent=11 // pred_fallthru
        _
    $region12: #{dis_inverse_dynamic_model.1} parent=5 // pred_fallthru
      _
    %p276 = scmp.lt.s32.totalorder %s15, 3
    // Predicated region
    $region41: #{dis_inverse_dynamic_model.1} parent=5 // pred_check
      %p277 = pneg %p276
    $region42: #{dis_inverse_dynamic_model.1} parent=5 // pred_check_branch
      %279 = sbr.rel (%p277) target = $region44
    $region43: #{dis_inverse_dynamic_model.1} parent=5 // pred_region
      // Predicated region
      $region45: #{dis_inverse_dynamic_model.1} parent=43 // pred_check
        %p280 = pneg %p35
      $region46: #{dis_inverse_dynamic_model.1} parent=43 // pred_check_branch
        %282 = sbr.rel (%p280) target = $region48
      $region47: #{dis_inverse_dynamic_model.1} parent=43 // pred_region
        %p283 = scmp.lt.s32.totalorder %s15, 2
        %s284 = scalar_select %p283, %s15, 2
        %s285 = smul.addr %s284, 8
        %s286 = scalar_lea.vmem %s0, %s285
      $region48: #{dis_inverse_dynamic_model.1} parent=43 // pred_fallthru
        _
      // Predicated region
      $region49: #{dis_inverse_dynamic_model.1} parent=43 // pred_check
        %p287 = pneg %p61
      $region50: #{dis_inverse_dynamic_model.1} parent=43 // pred_check_branch
        %289 = sbr.rel (%p287) target = $region52
      $region51: #{dis_inverse_dynamic_model.1} parent=43 // pred_region
        %p290 = scmp.lt.s32.totalorder %s15, 2
        %s291 = scalar_select %p290, %s15, 2
        %s292 = smul.addr %s291, 8
        %s293 = scalar_lea.vmem %s1, %s292
      $region52: #{dis_inverse_dynamic_model.1} parent=43 // pred_fallthru
        _
    $region44: #{dis_inverse_dynamic_model.1} parent=5 // pred_fallthru
      _
    %p294 = scmp.le.s32.totalorder 1, %s15
    %p295 = scmp.lt.s32.totalorder %s15, 4
    %p296 = pnand %p294, %p295
    %p297 = pneg %p296
    // Predicated region
    $region53: #{dis_inverse_dynamic_model.1} parent=5 // pred_check
      _
    $region54: #{dis_inverse_dynamic_model.1} parent=5 // pred_check_branch
      %299 = sbr.rel (%p296) target = $region56
    $region55: #{dis_inverse_dynamic_model.1} parent=5 // pred_region
      %s300 = ssub.s32 %s15, 1
      %p301 = scmp.lt.s32.totalorder %s20, 2
      %s302 = scalar_select %p301, %s20, 2
      %s303 = smul.addr %s302, 8
      %s304 = scalar_lea.vmem %s0, %s303
      %p305 = pneg %p41
      %p306 = pneg %p38
      %p307 = scmp.lt.s32.totalorder %s20, 2
      %s308 = scalar_select %p307, %s20, 2
      %s309 = smul.addr %s308, 8
      %s310 = scalar_lea.vmem %s1, %s309
      %p311 = pneg %p67
      %p312 = pneg %p64
      %p313 = pneg %p88
      %p314 = pneg %p85
      %p315 = pneg %p109
      %p316 = pneg %p106
      %p317 = pneg %p130
      %p318 = pneg %p127
      %p319 = pneg %p151
      %p320 = pneg %p148
      %p321 = pneg %p172
      %p322 = pneg %p169
      %p323 = pneg %p193
      %p324 = pneg %p190
      %p325 = pneg %p214
      %p326 = pneg %p211
      %p327 = pneg %p240
      %p328 = pneg %p237
      %p329 = scmp.lt.s32.totalorder %s20, 2
      %s330 = scalar_select %p329, %s20, 2
      %s331 = smul.addr %s330, 4
      %s332 = scalar_lea.vmem %s9, %s331
      %p333 = scmp.lt.s32.totalorder %s20, 2
      %s334 = scalar_select %p333, %s20, 2
      %s335 = smul.addr %s334, 8
      %s336 = scalar_lea.vmem %s0, %s335
      %p337 = scmp.lt.s32.totalorder %s20, 2
      %s338 = scalar_select %p337, %s20, 2
      %s339 = smul.addr %s338, 8
      %s340 = scalar_lea.vmem %s1, %s339
      %p341 = scmp.lt.s32.totalorder %s20, 2
      %s342 = scalar_select %p341, %s20, 2
      %s343 = smul.addr %s342, 4
      %s344 = scalar_lea.vmem %s9, %s343
      %v346 = vld [vmem:[%s336] sm:$0xff]
      %v347 = vpack.c.bf16 %v346, %v346
      %v348 = vld [vmem:[%s340] sm:$0xff]
      %v349 = vpack.c.bf16 %v348, %v348
      %v350 = vld [vmem:[%s2] sm:$0xf]
      %v351 = vld [vmem:[%s2 + $0x4] sm:$0xf]
      %v352 = vld [vmem:[%s3] sm:$0xf]
      %v353 = vld [vmem:[%s3 + $0x4] sm:$0xf]
      %v356 = vunpack.c.l.b16 %v352
      %v357 = vunpack.c.l.b16 %v353
      %v358 = vpack.c.b16 %v357, %v356
      %vm360 = vcmask 130048
      %v362 = vsel %vm360, %v349, 0
      %364 = vmatprep.subr.bf16.mxu0 0
      %365 = vmatpush1.bf16.msra.mxu0 %v358
      %366 = vmatprep.subr.bf16.mxu0 0
      %367 = vmatpush1.bf16.msra.mxu0 0
      %368 = vmatprep.subr.bf16.mxu0 0
      %369 = vmatpush1.bf16.msra.mxu0 0
      %370 = vmatprep.subr.bf16.mxu0 0
      %371 = vmatpush1.bf16.msra.mxu0 0
      %372 = vmatprep.subr.bf16.mxu0 0
      %373 = vmatpush1.bf16.msra.mxu0 0
      %374 = vmatprep.subr.bf16.mxu0 0
      %375 = vmatpush1.bf16.msra.mxu0 0
      %376 = vmatprep.subr.bf16.mxu0 0
      %377 = vmatpush1.bf16.msra.mxu0 0
      %378 = vmatprep.subr.bf16.mxu0 0
      %379 = vmatpush1.bf16.msra.mxu0 0
      %380 = vmatprep.subr.bf16.mxu0 0
      %381 = vmatpush1.bf16.msra.mxu0 0
      %382 = vmatprep.subr.bf16.mxu0 0
      %383 = vmatpush1.bf16.msra.mxu0 0
      %384 = vmatprep.subr.bf16.mxu0 0
      %385 = vmatpush1.bf16.msra.mxu0 0
      %386 = vmatprep.subr.bf16.mxu0 0
      %387 = vmatpush1.bf16.msra.mxu0 0
      %388 = vmatprep.subr.bf16.mxu0 0
      %389 = vmatpush1.bf16.msra.mxu0 0
      %390 = vmatprep.subr.bf16.mxu0 0
      %391 = vmatpush1.bf16.msra.mxu0 0
      %392 = vmatprep.subr.bf16.mxu0 0
      %393 = vmatpush1.bf16.msra.mxu0 0
      %394 = vmatprep.subr.bf16.mxu0 0
      %395 = vmatpush1.bf16.msra.mxu0 0
      %396 = vmatprep.mubr.bf16.mxu0 0
      %397 = vmatmul.mubr.bf16.gmra.mrb[0].mxu0 %v362
      %v398 = vpop.f32.mrb[0].mxu0
      %v399 = vadd.f32 0.0, %v398
      %v400 = vpop.f32.mrb[0].mxu0
      %v401 = vpop.f32.mrb[0].mxu0
      %v402 = vpop.f32.mrb[0].mxu0
      %403 = vdwg.mxu0
      %v406 = vunpack.c.l.b16 %v350
      %v407 = vunpack.c.l.b16 %v351
      %v408 = vpack.c.b16 %v407, %v406
      %v411 = vsel %vm360, %v347, 0
      %413 = vmatprep.subr.bf16.mxu0 0
      %414 = vmatpush1.bf16.msra.mxu0 %v408
      %415 = vmatprep.subr.bf16.mxu0 0
      %416 = vmatpush1.bf16.msra.mxu0 0
      %417 = vmatprep.subr.bf16.mxu0 0
      %418 = vmatpush1.bf16.msra.mxu0 0
      %419 = vmatprep.subr.bf16.mxu0 0
      %420 = vmatpush1.bf16.msra.mxu0 0
      %421 = vmatprep.subr.bf16.mxu0 0
      %422 = vmatpush1.bf16.msra.mxu0 0
      %423 = vmatprep.subr.bf16.mxu0 0
      %424 = vmatpush1.bf16.msra.mxu0 0
      %425 = vmatprep.subr.bf16.mxu0 0
      %426 = vmatpush1.bf16.msra.mxu0 0
      %427 = vmatprep.subr.bf16.mxu0 0
      %428 = vmatpush1.bf16.msra.mxu0 0
      %429 = vmatprep.subr.bf16.mxu0 0
      %430 = vmatpush1.bf16.msra.mxu0 0
      %431 = vmatprep.subr.bf16.mxu0 0
      %432 = vmatpush1.bf16.msra.mxu0 0
      %433 = vmatprep.subr.bf16.mxu0 0
      %434 = vmatpush1.bf16.msra.mxu0 0
      %435 = vmatprep.subr.bf16.mxu0 0
      %436 = vmatpush1.bf16.msra.mxu0 0
      %437 = vmatprep.subr.bf16.mxu0 0
      %438 = vmatpush1.bf16.msra.mxu0 0
      %439 = vmatprep.subr.bf16.mxu0 0
      %440 = vmatpush1.bf16.msra.mxu0 0
      %441 = vmatprep.subr.bf16.mxu0 0
      %442 = vmatpush1.bf16.msra.mxu0 0
      %443 = vmatprep.subr.bf16.mxu0 0
      %444 = vmatpush1.bf16.msra.mxu0 0
      %445 = vmatprep.mubr.bf16.mxu0 0
      %446 = vmatmul.mubr.bf16.gmra.mrb[0].mxu0 %v411
      %v447 = vpop.f32.mrb[0].mxu0
      %v448 = vadd.f32 %v399, %v447
      %v449 = vpop.f32.mrb[0].mxu0
      %v450 = vpop.f32.mrb[0].mxu0
      %v451 = vpop.f32.mrb[0].mxu0
      %452 = vdwg.mxu0
      %v453 = vld [vmem:[%s4] sm:$0x1]
      %v455 = vlaneseq
      %v456 = vshrl.u32 %v455, 7
      %v457 = vsub.s32 0, %v456
      %v458 = vrot.slane %v453, %v457
      %v460 = vadd.f32 %v448, %v458
      %v461 = vmax.f32 %v460, 0.0
      %v462 = vpack.c.bf16 %v461, %v461
      %v463 = vld [vmem:[%s5] sm:$0xf]
      %v464 = vld [vmem:[%s5 + $0x4] sm:$0xf]
      %v465 = vld [vmem:[%s5 + $0x8] sm:$0xf]
      %v466 = vld [vmem:[%s5 + $0xc] sm:$0xf]
      %v467 = vld [vmem:[%s5 + $0x10] sm:$0xf]
      %v468 = vld [vmem:[%s5 + $0x14] sm:$0xf]
      %v469 = vld [vmem:[%s5 + $0x18] sm:$0xf]
      %v470 = vld [vmem:[%s5 + $0x1c] sm:$0xf]
      %v471 = vld [vmem:[%s5 + $0x20] sm:$0xf]
      %v472 = vld [vmem:[%s5 + $0x24] sm:$0xf]
      %v473 = vld [vmem:[%s5 + $0x28] sm:$0xf]
      %v474 = vld [vmem:[%s5 + $0x2c] sm:$0xf]
      %v475 = vld [vmem:[%s5 + $0x30] sm:$0xf]
      %v476 = vld [vmem:[%s5 + $0x34] sm:$0xf]
      %v477 = vld [vmem:[%s5 + $0x38] sm:$0xf]
      %v478 = vld [vmem:[%s5 + $0x3c] sm:$0xf]
      %v479 = vld [vmem:[%s6] sm:$0x1]
      %v481 = vlaneseq
      %v482 = vshrl.u32 %v481, 7
      %v483 = vsub.s32 0, %v482
      %v484 = vrot.slane %v479, %v483
      %v502 = vunpack.c.l.b16 %v463
      %v503 = vunpack.c.l.b16 %v464
      %v504 = vunpack.c.l.b16 %v465
      %v505 = vunpack.c.l.b16 %v466
      %v506 = vunpack.c.l.b16 %v467
      %v507 = vunpack.c.l.b16 %v468
      %v508 = vunpack.c.l.b16 %v469
      %v509 = vunpack.c.l.b16 %v470
      %v510 = vunpack.c.l.b16 %v471
      %v511 = vunpack.c.l.b16 %v472
      %v512 = vunpack.c.l.b16 %v473
      %v513 = vunpack.c.l.b16 %v474
      %v514 = vunpack.c.l.b16 %v475
      %v515 = vunpack.c.l.b16 %v476
      %v516 = vunpack.c.l.b16 %v477
      %v517 = vunpack.c.l.b16 %v478
      %v518 = vpack.c.b16 %v503, %v502
      %v519 = vpack.c.b16 %v505, %v504
      %v520 = vpack.c.b16 %v507, %v506
      %v521 = vpack.c.b16 %v509, %v508
      %v522 = vpack.c.b16 %v511, %v510
      %v523 = vpack.c.b16 %v513, %v512
      %v524 = vpack.c.b16 %v515, %v514
      %v525 = vpack.c.b16 %v517, %v516
      %534 = vmatprep.subr.bf16.mxu0 0
      %535 = vmatpush1.bf16.msra.mxu0 %v518
      %536 = vmatprep.subr.bf16.mxu0 0
      %537 = vmatpush1.bf16.msra.mxu0 %v519
      %538 = vmatprep.subr.bf16.mxu0 0
      %539 = vmatpush1.bf16.msra.mxu0 %v520
      %540 = vmatprep.subr.bf16.mxu0 0
      %541 = vmatpush1.bf16.msra.mxu0 %v521
      %542 = vmatprep.subr.bf16.mxu0 0
      %543 = vmatpush1.bf16.msra.mxu0 %v522
      %544 = vmatprep.subr.bf16.mxu0 0
      %545 = vmatpush1.bf16.msra.mxu0 %v523
      %546 = vmatprep.subr.bf16.mxu0 0
      %547 = vmatpush1.bf16.msra.mxu0 %v524
      %548 = vmatprep.subr.bf16.mxu0 0
      %549 = vmatpush1.bf16.msra.mxu0 %v525
      %550 = vmatprep.subr.bf16.mxu0 0
      %551 = vmatpush1.bf16.msra.mxu0 0
      %552 = vmatprep.subr.bf16.mxu0 0
      %553 = vmatpush1.bf16.msra.mxu0 0
      %554 = vmatprep.subr.bf16.mxu0 0
      %555 = vmatpush1.bf16.msra.mxu0 0
      %556 = vmatprep.subr.bf16.mxu0 0
      %557 = vmatpush1.bf16.msra.mxu0 0
      %558 = vmatprep.subr.bf16.mxu0 0
      %559 = vmatpush1.bf16.msra.mxu0 0
      %560 = vmatprep.subr.bf16.mxu0 0
      %561 = vmatpush1.bf16.msra.mxu0 0
      %562 = vmatprep.subr.bf16.mxu0 0
      %563 = vmatpush1.bf16.msra.mxu0 0
      %564 = vmatprep.subr.bf16.mxu0 0
      %565 = vmatpush1.bf16.msra.mxu0 0
      %566 = vmatprep.mubr.bf16.mxu0 0
      %567 = vmatmul.mubr.bf16.gmra.mrb[0].mxu0 %v462
      %v568 = vpop.f32.mrb[0].mxu0
      %v569 = vadd.f32 %v484, %v568
      %v570 = vpop.f32.mrb[0].mxu0
      %v571 = vpop.f32.mrb[0].mxu0
      %v572 = vpop.f32.mrb[0].mxu0
      %573 = vdwg.mxu0
      %v574 = vmax.f32 %v569, 0.0
      %v575 = vpack.c.bf16 %v574, %v574
      %v576 = vld [vmem:[%s7] sm:$0xf]
      %v577 = vld [vmem:[%s7 + $0x4] sm:$0xf]
      %v578 = vld [vmem:[%s7 + $0x8] sm:$0xf]
      %v579 = vld [vmem:[%s7 + $0xc] sm:$0xf]
      %v580 = vld [vmem:[%s7 + $0x10] sm:$0xf]
      %v581 = vld [vmem:[%s7 + $0x14] sm:$0xf]
      %v582 = vld [vmem:[%s7 + $0x18] sm:$0xf]
      %v583 = vld [vmem:[%s7 + $0x1c] sm:$0xf]
      %v584 = vld [vmem:[%s7 + $0x20] sm:$0xf]
      %v585 = vld [vmem:[%s7 + $0x24] sm:$0xf]
      %v586 = vld [vmem:[%s7 + $0x28] sm:$0xf]
      %v587 = vld [vmem:[%s7 + $0x2c] sm:$0xf]
      %v588 = vld [vmem:[%s7 + $0x30] sm:$0xf]
      %v589 = vld [vmem:[%s7 + $0x34] sm:$0xf]
      %v590 = vld [vmem:[%s7 + $0x38] sm:$0xf]
      %v591 = vld [vmem:[%s7 + $0x3c] sm:$0xf]
      %v592 = vld [vmem:[%s8] sm:$0x1]
      %v594 = vlaneseq
      %v595 = vshrl.u32 %v594, 7
      %v596 = vsub.s32 0, %v595
      %v597 = vrot.slane %v592, %v596
      %v615 = vunpack.c.l.b16 %v576
      %v616 = vunpack.c.l.b16 %v577
      %v617 = vunpack.c.l.b16 %v578
      %v618 = vunpack.c.l.b16 %v579
      %v619 = vunpack.c.l.b16 %v580
      %v620 = vunpack.c.l.b16 %v581
      %v621 = vunpack.c.l.b16 %v582
      %v622 = vunpack.c.l.b16 %v583
      %v623 = vunpack.c.l.b16 %v584
      %v624 = vunpack.c.l.b16 %v585
      %v625 = vunpack.c.l.b16 %v586
      %v626 = vunpack.c.l.b16 %v587
      %v627 = vunpack.c.l.b16 %v588
      %v628 = vunpack.c.l.b16 %v589
      %v629 = vunpack.c.l.b16 %v590
      %v630 = vunpack.c.l.b16 %v591
      %v631 = vpack.c.b16 %v616, %v615
      %v632 = vpack.c.b16 %v618, %v617
      %v633 = vpack.c.b16 %v620, %v619
      %v634 = vpack.c.b16 %v622, %v621
      %v635 = vpack.c.b16 %v624, %v623
      %v636 = vpack.c.b16 %v626, %v625
      %v637 = vpack.c.b16 %v628, %v627
      %v638 = vpack.c.b16 %v630, %v629
      %647 = vmatprep.subr.bf16.mxu0 0
      %648 = vmatpush1.bf16.msra.mxu0 %v631
      %649 = vmatprep.subr.bf16.mxu0 0
      %650 = vmatpush1.bf16.msra.mxu0 %v632
      %651 = vmatprep.subr.bf16.mxu0 0
      %652 = vmatpush1.bf16.msra.mxu0 %v633
      %653 = vmatprep.subr.bf16.mxu0 0
      %654 = vmatpush1.bf16.msra.mxu0 %v634
      %655 = vmatprep.subr.bf16.mxu0 0
      %656 = vmatpush1.bf16.msra.mxu0 %v635
      %657 = vmatprep.subr.bf16.mxu0 0
      %658 = vmatpush1.bf16.msra.mxu0 %v636
      %659 = vmatprep.subr.bf16.mxu0 0
      %660 = vmatpush1.bf16.msra.mxu0 %v637
      %661 = vmatprep.subr.bf16.mxu0 0
      %662 = vmatpush1.bf16.msra.mxu0 %v638
      %663 = vmatprep.subr.bf16.mxu0 0
      %664 = vmatpush1.bf16.msra.mxu0 0
      %665 = vmatprep.subr.bf16.mxu0 0
      %666 = vmatpush1.bf16.msra.mxu0 0
      %667 = vmatprep.subr.bf16.mxu0 0
      %668 = vmatpush1.bf16.msra.mxu0 0
      %669 = vmatprep.subr.bf16.mxu0 0
      %670 = vmatpush1.bf16.msra.mxu0 0
      %671 = vmatprep.subr.bf16.mxu0 0
      %672 = vmatpush1.bf16.msra.mxu0 0
      %673 = vmatprep.subr.bf16.mxu0 0
      %674 = vmatpush1.bf16.msra.mxu0 0
      %675 = vmatprep.subr.bf16.mxu0 0
      %676 = vmatpush1.bf16.msra.mxu0 0
      %677 = vmatprep.subr.bf16.mxu0 0
      %678 = vmatpush1.bf16.msra.mxu0 0
      %679 = vmatprep.mubr.bf16.mxu0 0
      %680 = vmatmul.mubr.bf16.gmra.mrb[0].mxu0 %v575
      %v681 = vpop.f32.mrb[0].mxu0
      %v682 = vadd.f32 %v597, %v681
      %v683 = vpop.f32.mrb[0].mxu0
      %v684 = vpop.f32.mrb[0].mxu0
      %v685 = vpop.f32.mrb[0].mxu0
      %686 = vdwg.mxu0
      %687 = vmax.xlane.f32.xlu0 %v682
      %v688 = vpop.xlane.xlu0 %687
      %v689 = vsub.f32 %v682, %v688
      %v690 = vmul.f32 %v689, 1.442695
      %v691 = vpow.pop %v690
      %692 = vadd.xlane.f32.xlu0 %v691
      %v693 = vpop.xlane.xlu0 %692
      %v694 = vrcp.pop %v693
      %v695 = vmul.f32 %v691, %v694
      %v696 = vpack.c.bf16 %v695, %v695
      %697 = vst [vmem:[%s344] sm:$0xf] %v696
      %p698 = scmp.lt.s32.totalorder %s20, 2
      %s699 = scalar_select %p698, %s20, 2
      %s700 = smul.addr %s699, 4
      %s701 = scalar_lea.vmem %s9, %s700
      // Predicated region
      $region57: #{dis_inverse_dynamic_model.1} parent=55 // pred_check
        %p702 = pneg %p237
      $region58: #{dis_inverse_dynamic_model.1} parent=55 // pred_check_branch
        %704 = sbr.rel (%p702) target = $region60
      $region59: #{dis_inverse_dynamic_model.1} parent=55 // pred_region
        _
      $region60: #{dis_inverse_dynamic_model.1} parent=55 // pred_fallthru
        _
    $region56: #{dis_inverse_dynamic_model.1} parent=5 // pred_fallthru
      _
    %p705 = scmp.le.s32.totalorder 2, %s15
    // Predicated region
    $region61: #{dis_inverse_dynamic_model.1} parent=5 // pred_check
      %p706 = pneg %p705
    $region62: #{dis_inverse_dynamic_model.1} parent=5 // pred_check_branch
      %708 = sbr.rel (%p706) target = $region64
    $region63: #{dis_inverse_dynamic_model.1} parent=5 // pred_region
      %s709 = ssub.s32 %s15, 2
      // Predicated region
      $region65: #{dis_inverse_dynamic_model.1} parent=63 // pred_check
        %p710 = pneg %p243
      $region66: #{dis_inverse_dynamic_model.1} parent=63 // pred_check_branch
        %712 = sbr.rel (%p710) target = $region68
      $region67: #{dis_inverse_dynamic_model.1} parent=63 // pred_region
        %p713 = scmp.lt.s32.totalorder %s21, 2
        %s714 = scalar_select %p713, %s21, 2
        %s715 = smul.addr %s714, 4
        %s716 = scalar_lea.vmem %s9, %s715
      $region68: #{dis_inverse_dynamic_model.1} parent=63 // pred_fallthru
        _
    $region64: #{dis_inverse_dynamic_model.1} parent=5 // pred_fallthru
      _
  $region6: #{dis_inverse_dynamic_model.1} parent=0 // loop_footer
    %s19 = sadd.s32 1, %s15
  $region7: #{dis_inverse_dynamic_model.1} parent=0 // loop_footer_branch
    %14 = sbr.rel target = $region3
  $region8: #{dis_inverse_dynamic_model.1} parent=0 // loop_exit
    _

</llo_original>
